<compile_context>
chip_gen: v5e
topology: v5e:2x2
jax: 0.10.0
libtpu: 0.0.40
codegen_flags: <defaults>
</compile_context>

<pallas_src>
import functools

import jax
import jax.numpy as jnp
from jax.experimental import pallas as pl
from jax.experimental.pallas import tpu as pltpu


def _round_up(x, m):
    return ((x + m - 1) // m) * m


# ----------------------------------------------------------------------------
# Fused loss kernel: all four scalar losses in one pallas_call.
#   grid axis 0: tiles of the (padded) mask dimension Nm (reduction axis).
#   SEG-BCE and weighted-CE use resident full-array blocks, computed at step 0.
# ----------------------------------------------------------------------------
def _fused_loss_kernel(seg_logits_ref, seg_target_ref,
                       cls_logits_ref, cls_target_ref, cls_weight_ref,
                       pt_logits_ref, pt_labels_ref,
                       seg_out_ref, ce_out_ref, mask_out_ref, dice_out_ref,
                       ce_acc_ref, dice_acc_ref,
                       *, pos_weight, inv_seg_elems, inv_num_points,
                       inv_num_masks, num_valid_rows, tile_nm):
    step = pl.program_id(0)
    last = pl.num_programs(0) - 1

    # ---------------- one-shot losses + accumulator init (step 0) -----------
    @pl.when(step == 0)
    def _init_and_one_shot():
        # (a) loss_SEG_class: BCEWithLogits(pos_weight), mean reduction.
        x = seg_logits_ref[...]                       # (B, Q) f32
        t = seg_target_ref[...]
        e = jnp.exp(-jnp.abs(x))                      # one exp / element
        log1pe = jnp.log(1.0 + e)                     # one log / element
        sp_neg = jnp.maximum(-x, 0.0) + log1pe        # softplus(-x)
        sp_pos = sp_neg + x                           # softplus(x)
        bce = pos_weight * t * sp_neg + (1.0 - t) * sp_pos
        seg_out_ref[0] = jnp.sum(bce * inv_seg_elems)

        # (b) loss_class_name_class: weighted cross entropy.
        #     Layout: classes on sublanes, rows (B*Q) lane-dense.
        z = cls_logits_ref[...]                       # (C, N) f32
        tgt = cls_target_ref[...]                     # (1, N) int32
        w = cls_weight_ref[...]                       # (C, 1) f32
        c, n = z.shape
        cls_iota = jax.lax.broadcasted_iota(jnp.int32, (c, n), 0)
        onehot = (cls_iota == tgt).astype(jnp.float32)                      # (C,N)
        m = jnp.max(z, axis=0, keepdims=True)                               # (1,N)
        lse = m + jnp.log(jnp.sum(jnp.exp(z - m), axis=0, keepdims=True))   # (1,N)
        xt = jnp.sum(onehot * z, axis=0, keepdims=True)                     # (1,N)
        wr = jnp.sum(onehot * w, axis=0, keepdims=True)                     # (1,N)
        num_v = jnp.sum(wr * (lse - xt), axis=1, keepdims=True)             # (1,1)
        den_v = jnp.sum(wr, axis=1, keepdims=True)                          # (1,1)
        ce_out_ref[0] = jnp.sum(num_v / den_v)

        # zero the point-loss accumulators
        ce_acc_ref[...] = jnp.zeros_like(ce_acc_ref)
        dice_acc_ref[...] = jnp.zeros_like(dice_acc_ref)

    # ---------------- tiled point losses (every step) ------------------------
    x = pt_logits_ref[...]                            # (tile_nm, P) f32
    t = pt_labels_ref[...]
    e = jnp.exp(-jnp.abs(x))                          # one exp / element
    one_p_e = 1.0 + e
    sp_neg = jnp.maximum(-x, 0.0) + jnp.log(one_p_e)  # softplus(-x)
    sp_pos = sp_neg + x                               # softplus(x)
    ce = t * sp_neg + (1.0 - t) * sp_pos              # BCE with logits
    # sigmoid from the same exp; reciprocal goes to EUP (approx), sign select on VPU
    p = jnp.where(x >= 0.0, 1.0, e) * pl.reciprocal(one_p_e, approx=True)

    # mask rows that were padded to reach a multiple of tile_nm
    row_ids = jax.lax.broadcasted_iota(jnp.int32, (tile_nm, 1), 0) + step * tile_nm
    valid = (row_ids < num_valid_rows).astype(jnp.float32)                  # (tile_nm,1)

    ce_row = jnp.sum(ce, axis=1, keepdims=True) * inv_num_points            # mean over P
    numer = 2.0 * jnp.sum(p * t, axis=1, keepdims=True)
    denom = jnp.sum(p, axis=1, keepdims=True) + jnp.sum(t, axis=1, keepdims=True)
    dice_row = 1.0 - (numer + 1.0) / (denom + 1.0)                          # exact divide

    ce_acc_ref[...] += ce_row * valid
    dice_acc_ref[...] += dice_row * valid

    @pl.when(step == last)
    def _finalize():
        mask_out_ref[0] = jnp.sum(ce_acc_ref[...] * inv_num_masks)
        dice_out_ref[0] = jnp.sum(dice_acc_ref[...] * inv_num_masks)


def fused_criterion_losses(seg_logits, seg_target, cls_logits, target_classes,
                           class_weights, point_logits, point_labels, *,
                           pos_weight, num_masks):
    """Single pallas_call returning (loss_SEG_class, loss_class_name_class,
    loss_mask, loss_dice) as f32 scalars."""
    bsz, nq = seg_logits.shape
    num_class = cls_logits.shape[-1]
    n_rows = bsz * nq

    # lane-dense CE operands (rows on lanes, classes on sublanes)
    cls_logits_t = cls_logits.reshape(n_rows, num_class).T.astype(jnp.float32)  # (C, N)
    cls_target = target_classes.reshape(1, n_rows).astype(jnp.int32)            # (1, N)
    cls_w = class_weights.reshape(num_class, 1).astype(jnp.float32)             # (C, 1)

    nm, npts = point_logits.shape
    tile_nm = min(64, _round_up(max(nm, 1), 8))     # re-derive for VMEM budget
    nm_pad = _round_up(max(nm, 1), tile_nm)
    if nm_pad != nm:
        pad = ((0, nm_pad - nm), (0, 0))
        point_logits = jnp.pad(point_logits, pad)
        point_labels = jnp.pad(point_labels, pad)
    grid = (nm_pad // tile_nm,)

    kernel = functools.partial(
        _fused_loss_kernel,
        pos_weight=float(pos_weight),
        inv_seg_elems=1.0 / float(bsz * nq),
        inv_num_points=1.0 / float(npts),
        inv_num_masks=1.0 / float(num_masks),
        num_valid_rows=int(nm),
        tile_nm=int(tile_nm),
    )

    full = lambda i: (0, 0)   # resident blocks (DMA'd once, reused every step)
    smem_scalar = pl.BlockSpec(memory_space=pltpu.MemorySpace.SMEM)

    outs = pl.pallas_call(
        kernel,
        grid=grid,
        in_specs=[
            pl.BlockSpec((bsz, nq), full),                      # seg logits
            pl.BlockSpec((bsz, nq), full),                      # seg target
            pl.BlockSpec((num_class, n_rows), full),            # cls logits (C,N)
            pl.BlockSpec((1, n_rows), full),                    # cls target (1,N)
            pl.BlockSpec((num_class, 1), full),                 # class weights
            pl.BlockSpec((tile_nm, npts), lambda i: (i, 0)),    # point logits tile
            pl.BlockSpec((tile_nm, npts), lambda i: (i, 0)),    # point labels tile
        ],
        out_specs=(smem_scalar, smem_scalar, smem_scalar, smem_scalar),
        out_shape=(
            jax.ShapeDtypeStruct((1,), jnp.float32),
            jax.ShapeDtypeStruct((1,), jnp.float32),
            jax.ShapeDtypeStruct((1,), jnp.float32),
            jax.ShapeDtypeStruct((1,), jnp.float32),
        ),
        scratch_shapes=[
            pltpu.VMEM((tile_nm, 1), jnp.float32),   # ce row-sum accumulator
            pltpu.VMEM((tile_nm, 1), jnp.float32),   # dice row-sum accumulator
        ],
        compiler_params=pltpu.CompilerParams(
            dimension_semantics=("arbitrary",)),     # Nm axis is a reduction
    )(seg_logits.astype(jnp.float32), seg_target.astype(jnp.float32),
      cls_logits_t, cls_target, cls_w,
      point_logits.astype(jnp.float32), point_labels.astype(jnp.float32))

    seg, ce, mask, dice = outs
    return seg[0], ce[0], mask[0], dice[0]


# ----------------------------------------------------------------------------
# Plain-JAX glue: point sampling (no-grad, random, gather-heavy)
# ----------------------------------------------------------------------------
def point_sample(inp, coords):
    """Bilinear sample (grid_sample, align_corners=False, zero padding).

    inp:    (N, C, H, W) float32
    coords: (N, P, 2) in [0, 1], last dim = (x, y)
    returns (N, C, P)
    """
    n, c, h, w = inp.shape
    x = coords[..., 0] * 2.0 - 1.0
    y = coords[..., 1] * 2.0 - 1.0
    ix = ((x + 1.0) * w - 1.0) / 2.0
    iy = ((y + 1.0) * h - 1.0) / 2.0
    x0 = jnp.floor(ix)
    y0 = jnp.floor(iy)
    x1 = x0 + 1.0
    y1 = y0 + 1.0
    wx1 = ix - x0
    wx0 = 1.0 - wx1
    wy1 = iy - y0
    wy0 = 1.0 - wy1

    def gather(xi, yi):
        valid = ((xi >= 0) & (xi <= w - 1) & (yi >= 0) & (yi <= h - 1)).astype(inp.dtype)
        xi_c = jnp.clip(xi, 0, w - 1).astype(jnp.int32)
        yi_c = jnp.clip(yi, 0, h - 1).astype(jnp.int32)
        vals = jax.vmap(lambda im, yy, xx: im[:, yy, xx])(inp, yi_c, xi_c)  # (N, C, P)
        return vals * valid[:, None, :]

    v00 = gather(x0, y0)
    v01 = gather(x1, y0)
    v10 = gather(x0, y1)
    v11 = gather(x1, y1)
    out = (v00 * (wx0 * wy0)[:, None, :] + v01 * (wx1 * wy0)[:, None, :]
           + v10 * (wx0 * wy1)[:, None, :] + v11 * (wx1 * wy1)[:, None, :])
    return out
    # TODO(synk): if the XLA gather dominates the profile at production H,W,P,
    # replace it with a Pallas scalar-prefetch gather (point indices in SMEM).


def get_uncertain_point_coords_with_randomness(key, coarse_logits, num_points,
                                               oversample_ratio,
                                               importance_sample_ratio):
    num_boxes = coarse_logits.shape[0]
    num_sampled = int(num_points * oversample_ratio)
    k1, k2 = jax.random.split(key)
    point_coords = jax.random.uniform(k1, (num_boxes, num_sampled, 2), jnp.float32)
    point_logits = point_sample(coarse_logits, point_coords)          # (N, 1, S)
    point_uncertainties = -jnp.abs(point_logits)                      # calculate_uncertainty
    num_uncertain = int(importance_sample_ratio * num_points)
    num_random = num_points - num_uncertain
    _, idx = jax.lax.top_k(point_uncertainties[:, 0, :], num_uncertain)
    sel = jnp.take_along_axis(point_coords, idx[:, :, None], axis=1)  # (N, num_uncertain, 2)
    if num_random > 0:
        rand_coords = jax.random.uniform(k2, (num_boxes, num_random, 2), jnp.float32)
        sel = jnp.concatenate([sel, rand_coords], axis=1)
    return sel


# ----------------------------------------------------------------------------
# Criterion forward
# ----------------------------------------------------------------------------
def criterion_forward(outputs, targets, indices, *, num_points, oversample_ratio,
                      importance_sample_ratio, rng_key):
    # num_masks (clamped to >= 1); distributed all_reduce not applicable here.
    num_masks = float(sum(int(t["labels"].shape[0]) for t in targets))
    num_masks = max(num_masks, 1.0)

    # ---------------- loss_SEG_labels targets ----------------
    src_logits = outputs["pred_SEG_logits"].astype(jnp.float32)  # (B, Q)
    bsz, nq = src_logits.shape
    target_query = jnp.zeros_like(src_logits)
    for i, (index_i, _) in enumerate(indices):
        target_query = target_query.at[i, index_i].set(1.0)
    num_sample = bsz * nq
    pos_weight = (num_sample - num_masks) / num_masks

    # ---------------- loss_class_name_labels targets ----------------
    cls_logits = outputs["pred_class_name_logits"].astype(jnp.float32)  # (B, Q, C)
    num_class = cls_logits.shape[-1]
    batch_idx = jnp.concatenate([jnp.full_like(src, i) for i, (src, _) in enumerate(indices)])
    src_idx = jnp.concatenate([src for src, _ in indices])
    target_classes_o = jnp.concatenate(
        [t["labels"][J] for t, (_, J) in zip(targets, indices)]).astype(jnp.int32)
    target_classes = jnp.full((bsz, nq), num_class - 1, jnp.int32)
    target_classes = target_classes.at[batch_idx, src_idx].set(target_classes_o)
    class_weights = jnp.ones((num_class,), jnp.float32).at[-1].set(0.1)

    # ---------------- loss_masks: point sampling (plain-JAX glue) ------------
    tgt_batch_idx = jnp.concatenate([jnp.full_like(tgt, i) for i, (_, tgt) in enumerate(indices)])
    tgt_idx = jnp.concatenate([tgt for _, tgt in indices])

    src_masks = outputs["pred_masks"][batch_idx, src_idx].astype(jnp.float32)   # (Nm, H, W)
    max_gt = max(int(t["masks"].shape[0]) for t in targets)
    padded = jnp.stack([
        jnp.pad(t["masks"].astype(jnp.float32),
                ((0, max_gt - t["masks"].shape[0]), (0, 0), (0, 0)))
        for t in targets
    ])                                                                          # (B, max_gt, H, W)
    target_masks = padded[tgt_batch_idx, tgt_idx]                               # (Nm, H, W)

    src_masks = src_masks[:, None]          # (Nm, 1, H, W)
    target_masks = target_masks[:, None]    # (Nm, 1, H, W)

    # no-grad, randomized importance point sampling
    point_coords = get_uncertain_point_coords_with_randomness(
        rng_key, src_masks, num_points, oversample_ratio, importance_sample_ratio)
    # src & target masks share coords -> stack on the channel axis, sample once
    stacked = jnp.concatenate([src_masks, target_masks], axis=1)  # (Nm, 2, H, W)
    sampled = point_sample(stacked, point_coords)                 # (Nm, 2, P)
    point_logits = sampled[:, 0, :]                               # (Nm, P)
    point_labels = sampled[:, 1, :]                               # (Nm, P)

    # ---------------- single fused Pallas call ----------------
    loss_seg, loss_ce, loss_mask, loss_dice = fused_criterion_losses(
        src_logits, target_query, cls_logits, target_classes, class_weights,
        point_logits, point_labels, pos_weight=pos_weight, num_masks=num_masks)

    return {
        "loss_SEG_class": loss_seg,
        "loss_class_name_class": loss_ce,
        "loss_mask": loss_mask,
        "loss_dice": loss_dice,
    }


# ----------------------------------------------------------------------------
# Demo
# ----------------------------------------------------------------------------
if __name__ == "__main__":
    key = jax.random.PRNGKey(0)
    B, Q, C_CLS, H, W = 2, 8, 5, 16, 16
    NUM_POINTS, OVERSAMPLE, IMPORTANCE = 16, 3, 0.75

    k1, k2, k3, k4, k5 = jax.random.split(key, 5)
    outputs = {
        "pred_SEG_logits": jax.random.normal(k1, (B, Q), jnp.float32),
        "pred_class_name_logits": jax.random.normal(k2, (B, Q, C_CLS), jnp.float32),
        "pred_masks": jax.random.normal(k3, (B, Q, H, W), jnp.float32),
    }

    # synthetic ground-truth targets (binary masks + class labels)
    gt_labels = [jnp.array([0, 2], jnp.int32), jnp.array([1, 3, 0], jnp.int32)]
    mask_keys = jax.random.split(k4, 2)
    targets = [
        {
            "masks": (jax.random.uniform(mk, (int(lbl.shape[0]), H, W)) > 0.5).astype(jnp.float32),
            "labels": lbl,
        }
        for mk, lbl in zip(mask_keys, gt_labels)
    ]

    # TODO(synk): Hungarian matcher (self.matcher) is an external module; fixed
    # deterministic matching indices are used instead.
    indices = [
        (jnp.array([1, 4], jnp.int32), jnp.array([0, 1], jnp.int32)),
        (jnp.array([0, 2, 6], jnp.int32), jnp.array([0, 1, 2], jnp.int32)),
    ]

    losses = criterion_forward(
        outputs, targets, indices,
        num_points=NUM_POINTS,
        oversample_ratio=OVERSAMPLE,
        importance_sample_ratio=IMPORTANCE,
        rng_key=k5,
    )
    for v in losses.values():
        jax.block_until_ready(v)
    print("KERNEL_OK")
</pallas_src>

<mosaic_0001>
module attributes {stable_mosaic.version = 11 : i64} {
  func.func @_fused_loss_kernel(%arg0: i32, %arg1: memref<2x8xf32, #tpu.memory_space<vmem>>, %arg2: memref<2x8xf32, #tpu.memory_space<vmem>>, %arg3: memref<5x16xf32, #tpu.memory_space<vmem>>, %arg4: memref<1x16xi32, #tpu.memory_space<vmem>>, %arg5: memref<5x1xf32, #tpu.memory_space<vmem>>, %arg6: memref<8x16xf32, #tpu.memory_space<vmem>>, %arg7: memref<8x16xf32, #tpu.memory_space<vmem>>, %arg8: memref<1xf32, #tpu.memory_space<smem>>, %arg9: memref<1xf32, #tpu.memory_space<smem>>, %arg10: memref<1xf32, #tpu.memory_space<smem>>, %arg11: memref<1xf32, #tpu.memory_space<smem>>, %arg12: memref<8x1xf32, #tpu.memory_space<vmem>>, %arg13: memref<8x1xf32, #tpu.memory_space<vmem>>) attributes {dimension_semantics = [#tpu.dimension_semantics<arbitrary>], iteration_bounds = array<i64: 1>, scalar_prefetch = 0 : i64, scratch_operands = 2 : i64, tpu.core_type = #tpu.core_type<tc>, window_params = [{pipeline_mode = #tpu.pipeline_mode<synchronous>, transform_indices = @transform_0, window_bounds = array<i64: 2, 8>}, {pipeline_mode = #tpu.pipeline_mode<synchronous>, transform_indices = @transform_1, window_bounds = array<i64: 2, 8>}, {pipeline_mode = #tpu.pipeline_mode<synchronous>, transform_indices = @transform_2, window_bounds = array<i64: 5, 16>}, {pipeline_mode = #tpu.pipeline_mode<synchronous>, transform_indices = @transform_3, window_bounds = array<i64: 1, 16>}, {pipeline_mode = #tpu.pipeline_mode<synchronous>, transform_indices = @transform_4, window_bounds = array<i64: 5, 1>}, {transform_indices = @transform_5, window_bounds = array<i64: 8, 16>}, {transform_indices = @transform_6, window_bounds = array<i64: 8, 16>}, {transform_indices = @transform_7, window_bounds = array<i64: 1>}, {transform_indices = @transform_8, window_bounds = array<i64: 1>}, {transform_indices = @transform_9, window_bounds = array<i64: 1>}, {transform_indices = @transform_10, window_bounds = array<i64: 1>}]} {
    %c0_i32 = arith.constant 0 : i32
    %0 = arith.cmpi eq, %arg0, %c0_i32 : i32
    %1 = arith.extui %0 : i1 to i32
    %c0_i32_0 = arith.constant 0 : i32
    %2 = arith.cmpi ne, %1, %c0_i32_0 : i32
    scf.if %2 {
      %c0_29 = arith.constant 0 : index
      %c0_30 = arith.constant 0 : index
      %69 = vector.load %arg1[%c0_29, %c0_30] : memref<2x8xf32, #tpu.memory_space<vmem>>, vector<2x8xf32>
      %c0_31 = arith.constant 0 : index
      %c0_32 = arith.constant 0 : index
      %70 = vector.load %arg2[%c0_31, %c0_32] : memref<2x8xf32, #tpu.memory_space<vmem>>, vector<2x8xf32>
      %71 = math.absf %69 : vector<2x8xf32>
      %cst_33 = arith.constant 0.000000e+00 : f32
      %72 = vector.broadcast %cst_33 : f32 to vector<2x8xf32>
      %73 = arith.subf %72, %71 : vector<2x8xf32>
      %74 = math.exp %73 : vector<2x8xf32>
      %cst_34 = arith.constant 1.000000e+00 : f32
      %75 = vector.broadcast %cst_34 : f32 to vector<2x8xf32>
      %76 = arith.addf %75, %74 : vector<2x8xf32>
      %77 = math.log %76 : vector<2x8xf32>
      %cst_35 = arith.constant 0.000000e+00 : f32
      %78 = vector.broadcast %cst_35 : f32 to vector<2x8xf32>
      %79 = arith.subf %78, %69 : vector<2x8xf32>
      %cst_36 = arith.constant 0.000000e+00 : f32
      %80 = vector.broadcast %cst_36 : f32 to vector<2x8xf32>
      %81 = arith.maximumf %79, %80 : vector<2x8xf32>
      %82 = arith.addf %81, %77 : vector<2x8xf32>
      %83 = arith.addf %82, %69 : vector<2x8xf32>
      %cst_37 = arith.constant 2.200000e+00 : f32
      %84 = vector.broadcast %cst_37 : f32 to vector<2x8xf32>
      %85 = arith.mulf %84, %70 : vector<2x8xf32>
      %86 = arith.mulf %85, %82 : vector<2x8xf32>
      %cst_38 = arith.constant 1.000000e+00 : f32
      %87 = vector.broadcast %cst_38 : f32 to vector<2x8xf32>
      %88 = arith.subf %87, %70 : vector<2x8xf32>
      %89 = arith.mulf %88, %83 : vector<2x8xf32>
      %90 = arith.addf %86, %89 : vector<2x8xf32>
      %cst_39 = arith.constant 6.250000e-02 : f32
      %91 = vector.broadcast %cst_39 : f32 to vector<2x8xf32>
      %92 = arith.mulf %90, %91 : vector<2x8xf32>
      %93 = vector.shape_cast %92 : vector<2x8xf32> to vector<1x2x8xf32>
      %cst_40 = arith.constant dense<0.000000e+00> : vector<1xf32>
      %94 = vector.multi_reduction <add>, %93, %cst_40 [1, 2] : vector<1x2x8xf32> to vector<1xf32>
      %95 = vector.shape_cast %94 : vector<1xf32> to vector<1x1x1xf32>
      %96 = vector.extract %95[0, 0, 0] : f32 from vector<1x1x1xf32>
      %c0_41 = arith.constant 0 : index
      %97 = memref.load %arg8[%c0_41] : memref<1xf32, #tpu.memory_space<smem>>
      memref.store %96, %arg8[%c0_41] : memref<1xf32, #tpu.memory_space<smem>>
      %c0_42 = arith.constant 0 : index
      %c0_43 = arith.constant 0 : index
      %98 = vector.load %arg3[%c0_42, %c0_43] : memref<5x16xf32, #tpu.memory_space<vmem>>, vector<5x16xf32>
      %c0_44 = arith.constant 0 : index
      %c0_45 = arith.constant 0 : index
      %99 = vector.load %arg4[%c0_44, %c0_45] : memref<1x16xi32, #tpu.memory_space<vmem>>, vector<1x16xi32>
      %c0_46 = arith.constant 0 : index
      %c0_47 = arith.constant 0 : index
      %100 = vector.load %arg5[%c0_46, %c0_47] : memref<5x1xf32, #tpu.memory_space<vmem>>, vector<5x1xf32>
      %101 = tpu.iota {dimensions = array<i32: 0>} : vector<5x16xi32>
      %102 = vector.broadcast %99 : vector<1x16xi32> to vector<5x16xi32>
      %103 = arith.cmpi eq, %101, %102 : vector<5x16xi32>
      %104 = arith.extui %103 : vector<5x16xi1> to vector<5x16xi32>
      %105 = arith.sitofp %104 : vector<5x16xi32> to vector<5x16xf32>
      %cst_48 = arith.constant dense<0xFF800000> : vector<16xf32>
      %106 = vector.multi_reduction <maximumf>, %98, %cst_48 [0] : vector<5x16xf32> to vector<16xf32>
      %107 = vector.shape_cast %106 : vector<16xf32> to vector<1x16xf32>
      %108 = vector.broadcast %107 : vector<1x16xf32> to vector<5x16xf32>
      %109 = arith.subf %98, %108 : vector<5x16xf32>
      %110 = math.exp %109 : vector<5x16xf32>
      %cst_49 = arith.constant dense<0.000000e+00> : vector<16xf32>
      %111 = vector.multi_reduction <add>, %110, %cst_49 [0] : vector<5x16xf32> to vector<16xf32>
      %112 = vector.shape_cast %111 : vector<16xf32> to vector<1x16xf32>
      %113 = math.log %112 : vector<1x16xf32>
      %114 = arith.addf %107, %113 : vector<1x16xf32>
      %115 = arith.mulf %105, %98 : vector<5x16xf32>
      %cst_50 = arith.constant dense<0.000000e+00> : vector<16xf32>
      %116 = vector.multi_reduction <add>, %115, %cst_50 [0] : vector<5x16xf32> to vector<16xf32>
      %117 = vector.shape_cast %116 : vector<16xf32> to vector<1x16xf32>
      %118 = vector.broadcast %100 : vector<5x1xf32> to vector<5x16xf32>
      %119 = arith.mulf %105, %118 : vector<5x16xf32>
      %cst_51 = arith.constant dense<0.000000e+00> : vector<16xf32>
      %120 = vector.multi_reduction <add>, %119, %cst_51 [0] : vector<5x16xf32> to vector<16xf32>
      %121 = vector.shape_cast %120 : vector<16xf32> to vector<1x16xf32>
      %122 = arith.subf %114, %117 : vector<1x16xf32>
      %123 = arith.mulf %121, %122 : vector<1x16xf32>
      %cst_52 = arith.constant dense<0.000000e+00> : vector<1xf32>
      %124 = vector.multi_reduction <add>, %123, %cst_52 [1] : vector<1x16xf32> to vector<1xf32>
      %125 = vector.shape_cast %124 : vector<1xf32> to vector<1x1xf32>
      %cst_53 = arith.constant dense<0.000000e+00> : vector<1xf32>
      %126 = vector.multi_reduction <add>, %121, %cst_53 [1] : vector<1x16xf32> to vector<1xf32>
      %127 = vector.shape_cast %126 : vector<1xf32> to vector<1x1xf32>
      %128 = arith.divf %125, %127 : vector<1x1xf32>
      %129 = vector.shape_cast %128 : vector<1x1xf32> to vector<1x1x1xf32>
      %cst_54 = arith.constant dense<0.000000e+00> : vector<1xf32>
      %130 = vector.multi_reduction <add>, %129, %cst_54 [1, 2] : vector<1x1x1xf32> to vector<1xf32>
      %131 = vector.shape_cast %130 : vector<1xf32> to vector<1x1x1xf32>
      %132 = vector.extract %131[0, 0, 0] : f32 from vector<1x1x1xf32>
      %c0_55 = arith.constant 0 : index
      %133 = memref.load %arg9[%c0_55] : memref<1xf32, #tpu.memory_space<smem>>
      memref.store %132, %arg9[%c0_55] : memref<1xf32, #tpu.memory_space<smem>>
      %cst_56 = arith.constant 0.000000e+00 : f32
      %134 = vector.broadcast %cst_56 : f32 to vector<8x1xf32>
      %c0_57 = arith.constant 0 : index
      %c0_58 = arith.constant 0 : index
      %135 = vector.load %arg12[%c0_57, %c0_58] : memref<8x1xf32, #tpu.memory_space<vmem>>, vector<8x1xf32>
      tpu.vector_store %arg12[%c0_57, %c0_58], %134 {strides = array<i32>} : memref<8x1xf32, #tpu.memory_space<vmem>>, vector<8x1xf32>,
      %cst_59 = arith.constant 0.000000e+00 : f32
      %136 = vector.broadcast %cst_59 : f32 to vector<8x1xf32>
      %c0_60 = arith.constant 0 : index
      %c0_61 = arith.constant 0 : index
      %137 = vector.load %arg13[%c0_60, %c0_61] : memref<8x1xf32, #tpu.memory_space<vmem>>, vector<8x1xf32>
      tpu.vector_store %arg13[%c0_60, %c0_61], %136 {strides = array<i32>} : memref<8x1xf32, #tpu.memory_space<vmem>>, vector<8x1xf32>,
    } else {
    }
    %c0 = arith.constant 0 : index
    %c0_1 = arith.constant 0 : index
    %3 = vector.load %arg6[%c0, %c0_1] : memref<8x16xf32, #tpu.memory_space<vmem>>, vector<8x16xf32>
    %c0_2 = arith.constant 0 : index
    %c0_3 = arith.constant 0 : index
    %4 = vector.load %arg7[%c0_2, %c0_3] : memref<8x16xf32, #tpu.memory_space<vmem>>, vector<8x16xf32>
    %5 = math.absf %3 : vector<8x16xf32>
    %cst = arith.constant 0.000000e+00 : f32
    %6 = vector.broadcast %cst : f32 to vector<8x16xf32>
    %7 = arith.subf %6, %5 : vector<8x16xf32>
    %8 = math.exp %7 : vector<8x16xf32>
    %cst_4 = arith.constant 1.000000e+00 : f32
    %9 = vector.broadcast %cst_4 : f32 to vector<8x16xf32>
    %10 = arith.addf %9, %8 : vector<8x16xf32>
    %cst_5 = arith.constant 0.000000e+00 : f32
    %11 = vector.broadcast %cst_5 : f32 to vector<8x16xf32>
    %12 = arith.subf %11, %3 : vector<8x16xf32>
    %cst_6 = arith.constant 0.000000e+00 : f32
    %13 = vector.broadcast %cst_6 : f32 to vector<8x16xf32>
    %14 = arith.maximumf %12, %13 : vector<8x16xf32>
    %15 = math.log %10 : vector<8x16xf32>
    %16 = arith.addf %14, %15 : vector<8x16xf32>
    %17 = arith.addf %16, %3 : vector<8x16xf32>
    %18 = arith.mulf %4, %16 : vector<8x16xf32>
    %cst_7 = arith.constant 1.000000e+00 : f32
    %19 = vector.broadcast %cst_7 : f32 to vector<8x16xf32>
    %20 = arith.subf %19, %4 : vector<8x16xf32>
    %21 = arith.mulf %20, %17 : vector<8x16xf32>
    %22 = arith.addf %18, %21 : vector<8x16xf32>
    %cst_8 = arith.constant 0.000000e+00 : f32
    %23 = vector.broadcast %cst_8 : f32 to vector<8x16xf32>
    %24 = arith.cmpf oge, %3, %23 : vector<8x16xf32>
    %cst_9 = arith.constant 1.000000e+00 : f32
    %25 = vector.broadcast %cst_9 : f32 to vector<8x16xf32>
    %26 = arith.select %24, %25, %8 : vector<8x16xi1>, vector<8x16xf32>
    %27 = tpu.reciprocal %10 {approx = true} : vector<8x16xf32> -> vector<8x16xf32>
    %28 = arith.mulf %26, %27 : vector<8x16xf32>
    %29 = tpu.iota {dimensions = array<i32: 0>} : vector<8x1xi32>
    %c8_i32 = arith.constant 8 : i32
    %30 = arith.muli %arg0, %c8_i32 : i32
    %31 = vector.broadcast %30 : i32 to vector<8x1xi32>
    %32 = arith.addi %29, %31 : vector<8x1xi32>
    %c5_i32 = arith.constant 5 : i32
    %33 = vector.broadcast %c5_i32 : i32 to vector<8x1xi32>
    %34 = arith.cmpi slt, %32, %33 : vector<8x1xi32>
    %35 = arith.extui %34 : vector<8x1xi1> to vector<8x1xi32>
    %36 = arith.sitofp %35 : vector<8x1xi32> to vector<8x1xf32>
    %cst_10 = arith.constant dense<0.000000e+00> : vector<8xf32>
    %37 = vector.multi_reduction <add>, %22, %cst_10 [1] : vector<8x16xf32> to vector<8xf32>
    %38 = vector.shape_cast %37 : vector<8xf32> to vector<8x1xf32>
    %cst_11 = arith.constant 6.250000e-02 : f32
    %39 = vector.broadcast %cst_11 : f32 to vector<8x1xf32>
    %40 = arith.mulf %38, %39 : vector<8x1xf32>
    %41 = arith.mulf %28, %4 : vector<8x16xf32>
    %cst_12 = arith.constant dense<0.000000e+00> : vector<8xf32>
    %42 = vector.multi_reduction <add>, %41, %cst_12 [1] : vector<8x16xf32> to vector<8xf32>
    %43 = vector.shape_cast %42 : vector<8xf32> to vector<8x1xf32>
    %cst_13 = arith.constant 2.000000e+00 : f32
    %44 = vector.broadcast %cst_13 : f32 to vector<8x1xf32>
    %45 = arith.mulf %44, %43 : vector<8x1xf32>
    %cst_14 = arith.constant dense<0.000000e+00> : vector<8xf32>
    %46 = vector.multi_reduction <add>, %28, %cst_14 [1] : vector<8x16xf32> to vector<8xf32>
    %47 = vector.shape_cast %46 : vector<8xf32> to vector<8x1xf32>
    %cst_15 = arith.constant dense<0.000000e+00> : vector<8xf32>
    %48 = vector.multi_reduction <add>, %4, %cst_15 [1] : vector<8x16xf32> to vector<8xf32>
    %49 = vector.shape_cast %48 : vector<8xf32> to vector<8x1xf32>
    %50 = arith.addf %47, %49 : vector<8x1xf32>
    %cst_16 = arith.constant 1.000000e+00 : f32
    %51 = vector.broadcast %cst_16 : f32 to vector<8x1xf32>
    %52 = arith.addf %45, %51 : vector<8x1xf32>
    %cst_17 = arith.constant 1.000000e+00 : f32
    %53 = vector.broadcast %cst_17 : f32 to vector<8x1xf32>
    %54 = arith.addf %50, %53 : vector<8x1xf32>
    %55 = arith.divf %52, %54 : vector<8x1xf32>
    %cst_18 = arith.constant 1.000000e+00 : f32
    %56 = vector.broadcast %cst_18 : f32 to vector<8x1xf32>
    %57 = arith.subf %56, %55 : vector<8x1xf32>
    %c0_19 = arith.constant 0 : index
    %c0_20 = arith.constant 0 : index
    %58 = vector.load %arg12[%c0_19, %c0_20] : memref<8x1xf32, #tpu.memory_space<vmem>>, vector<8x1xf32>
    %59 = arith.mulf %40, %36 : vector<8x1xf32>
    %60 = arith.addf %58, %59 : vector<8x1xf32>
    %c0_21 = arith.constant 0 : index
    %c0_22 = arith.constant 0 : index
    %61 = vector.load %arg12[%c0_21, %c0_22] : memref<8x1xf32, #tpu.memory_space<vmem>>, vector<8x1xf32>
    tpu.vector_store %arg12[%c0_21, %c0_22], %60 {strides = array<i32>} : memref<8x1xf32, #tpu.memory_space<vmem>>, vector<8x1xf32>,
    %c0_23 = arith.constant 0 : index
    %c0_24 = arith.constant 0 : index
    %62 = vector.load %arg13[%c0_23, %c0_24] : memref<8x1xf32, #tpu.memory_space<vmem>>, vector<8x1xf32>
    %63 = arith.mulf %57, %36 : vector<8x1xf32>
    %64 = arith.addf %62, %63 : vector<8x1xf32>
    %c0_25 = arith.constant 0 : index
    %c0_26 = arith.constant 0 : index
    %65 = vector.load %arg13[%c0_25, %c0_26] : memref<8x1xf32, #tpu.memory_space<vmem>>, vector<8x1xf32>
    tpu.vector_store %arg13[%c0_25, %c0_26], %64 {strides = array<i32>} : memref<8x1xf32, #tpu.memory_space<vmem>>, vector<8x1xf32>,
    %c0_i32_27 = arith.constant 0 : i32
    %66 = arith.cmpi eq, %arg0, %c0_i32_27 : i32
    %67 = arith.extui %66 : i1 to i32
    %c0_i32_28 = arith.constant 0 : i32
    %68 = arith.cmpi ne, %67, %c0_i32_28 : i32
    scf.if %68 {
      %c0_29 = arith.constant 0 : index
      %c0_30 = arith.constant 0 : index
      %69 = vector.load %arg12[%c0_29, %c0_30] : memref<8x1xf32, #tpu.memory_space<vmem>>, vector<8x1xf32>
      %cst_31 = arith.constant 2.000000e-01 : f32
      %70 = vector.broadcast %cst_31 : f32 to vector<8x1xf32>
      %71 = arith.mulf %69, %70 : vector<8x1xf32>
      %72 = vector.shape_cast %71 : vector<8x1xf32> to vector<1x8x1xf32>
      %cst_32 = arith.constant dense<0.000000e+00> : vector<1xf32>
      %73 = vector.multi_reduction <add>, %72, %cst_32 [1, 2] : vector<1x8x1xf32> to vector<1xf32>
      %74 = vector.shape_cast %73 : vector<1xf32> to vector<1x1x1xf32>
      %75 = vector.extract %74[0, 0, 0] : f32 from vector<1x1x1xf32>
      %c0_33 = arith.constant 0 : index
      %76 = memref.load %arg10[%c0_33] : memref<1xf32, #tpu.memory_space<smem>>
      memref.store %75, %arg10[%c0_33] : memref<1xf32, #tpu.memory_space<smem>>
      %c0_34 = arith.constant 0 : index
      %c0_35 = arith.constant 0 : index
      %77 = vector.load %arg13[%c0_34, %c0_35] : memref<8x1xf32, #tpu.memory_space<vmem>>, vector<8x1xf32>
      %cst_36 = arith.constant 2.000000e-01 : f32
      %78 = vector.broadcast %cst_36 : f32 to vector<8x1xf32>
      %79 = arith.mulf %77, %78 : vector<8x1xf32>
      %80 = vector.shape_cast %79 : vector<8x1xf32> to vector<1x8x1xf32>
      %cst_37 = arith.constant dense<0.000000e+00> : vector<1xf32>
      %81 = vector.multi_reduction <add>, %80, %cst_37 [1, 2] : vector<1x8x1xf32> to vector<1xf32>
      %82 = vector.shape_cast %81 : vector<1xf32> to vector<1x1x1xf32>
      %83 = vector.extract %82[0, 0, 0] : f32 from vector<1x1x1xf32>
      %c0_38 = arith.constant 0 : index
      %84 = memref.load %arg11[%c0_38] : memref<1xf32, #tpu.memory_space<smem>>
      memref.store %83, %arg11[%c0_38] : memref<1xf32, #tpu.memory_space<smem>>
    } else {
    }
    return
  }
  func.func @transform_0(%arg0: i32) -> (i32, i32) {
    %c0_i32 = arith.constant 0 : i32
    %c0_i32_0 = arith.constant 0 : i32
    %c0_i32_1 = arith.constant 0 : i32
    return %c0_i32, %c0_i32_0 : i32, i32
  }
  func.func @transform_1(%arg0: i32) -> (i32, i32) {
    %c0_i32 = arith.constant 0 : i32
    %c0_i32_0 = arith.constant 0 : i32
    %c0_i32_1 = arith.constant 0 : i32
    return %c0_i32, %c0_i32_0 : i32, i32
  }
  func.func @transform_2(%arg0: i32) -> (i32, i32) {
    %c0_i32 = arith.constant 0 : i32
    %c0_i32_0 = arith.constant 0 : i32
    %c0_i32_1 = arith.constant 0 : i32
    return %c0_i32, %c0_i32_0 : i32, i32
  }
  func.func @transform_3(%arg0: i32) -> (i32, i32) {
    %c0_i32 = arith.constant 0 : i32
    %c0_i32_0 = arith.constant 0 : i32
    %c0_i32_1 = arith.constant 0 : i32
    return %c0_i32, %c0_i32_0 : i32, i32
  }
  func.func @transform_4(%arg0: i32) -> (i32, i32) {
    %c0_i32 = arith.constant 0 : i32
    %c0_i32_0 = arith.constant 0 : i32
    %c0_i32_1 = arith.constant 0 : i32
    return %c0_i32, %c0_i32_0 : i32, i32
  }
  func.func @transform_5(%arg0: i32) -> (i32, i32) {
    %c0_i32 = arith.constant 0 : i32
    %c0_i32_0 = arith.constant 0 : i32
    return %arg0, %c0_i32 : i32, i32
  }
  func.func @transform_6(%arg0: i32) -> (i32, i32) {
    %c0_i32 = arith.constant 0 : i32
    %c0_i32_0 = arith.constant 0 : i32
    return %arg0, %c0_i32 : i32, i32
  }
  func.func @transform_7(%arg0: i32) -> i32 {
    %c0_i32 = arith.constant 0 : i32
    %c0_i32_0 = arith.constant 0 : i32
    return %c0_i32 : i32
  }
  func.func @transform_8(%arg0: i32) -> i32 {
    %c0_i32 = arith.constant 0 : i32
    %c0_i32_0 = arith.constant 0 : i32
    return %c0_i32 : i32
  }
  func.func @transform_9(%arg0: i32) -> i32 {
    %c0_i32 = arith.constant 0 : i32
    %c0_i32_0 = arith.constant 0 : i32
    return %c0_i32 : i32
  }
  func.func @transform_10(%arg0: i32) -> i32 {
    %c0_i32 = arith.constant 0 : i32
    %c0_i32_0 = arith.constant 0 : i32
    return %c0_i32 : i32
  }
}

</mosaic_0001>

<llo_original>
// kernel: tpu_custom_call.1
$region0: #{tpu_custom_call.1}
  #allocation0 [shape = 'u32[]', space=smem, size = 0x4, offset = 0x4, fixed_abs, tag = 'smem constant byte address 0x4 - core index']
  #allocation1 [shape = 'u32[72,128]{1,0:T(1,128)}', space=vmem, size = 0x9000, scoped, tag = 'internal scratch']
  #allocation2 [shape = 'f32[8,1]{1,0:T(8,128)}', space=vmem, size = 0x1000, scoped, tag = 'scratch operand']
  #allocation3 [shape = 'f32[8,1]{1,0:T(8,128)}', space=vmem, size = 0x1000, scoped, tag = 'scratch operand']
  %s0 = inlined_call_operand.hbm [shape: f32[2,8], index: 0, kind: input, shape index: {}]
  %s1 = inlined_call_operand.hbm [shape: f32[2,8], index: 1, kind: input, shape index: {}]
  %s2 = inlined_call_operand.vmem [shape: f32[5,16], index: 2, kind: input, shape index: {}]
  %s3 = inlined_call_operand.vmem [shape: s32[1,16], index: 3, kind: input, shape index: {}]
  %s4 = inlined_call_operand.vmem [shape: f32[5,1], index: 4, kind: input, shape index: {}]
  %s5 = inlined_call_operand.hbm [shape: f32[8,16], index: 5, kind: input, shape index: {}]
  %s6 = inlined_call_operand.hbm [shape: f32[8,16], index: 6, kind: input, shape index: {}]
  %s7 = inlined_call_operand.hbm [shape: f32[1], index: 7, kind: output, shape index: {0}]
  %s8 = inlined_call_operand.hbm [shape: f32[1], index: 8, kind: output, shape index: {1}]
  %s9 = inlined_call_operand.hbm [shape: f32[1], index: 9, kind: output, shape index: {2}]
  %s10 = inlined_call_operand.hbm [shape: f32[1], index: 10, kind: output, shape index: {3}]
  %11 = xla_tuple %s7, %s8, %s9, %s10
  %s12 = sld [smem:[#allocation0]]
  $region86: #{tpu_custom_call.1} parent=0
    _
  %s14 = ssub.s32 1, %s12
  %s15 = scalar_select 0, %s14, %s12
  $region1: #{tpu_custom_call.1} parent=0
    #allocation4 [shape = 'u8[1024]{0}', space=vmem, size = 0x400, scoped, tag = 'input window, operand 0, single buffered']
    #allocation5 [shape = 's32[1]{0}', space=sflag, size = 0x4, scoped, tag = 'scoped memory for tpu_custom_call.1']
    #allocation6 [shape = 's32[1]{0}', space=sflag, size = 0x4, scoped, tag = 'scoped memory for tpu_custom_call.1']
    #allocation7 [shape = 'u8[1024]{0}', space=vmem, size = 0x400, scoped, tag = 'input window, operand 1, single buffered']
    #allocation8 [shape = 's32[1]{0}', space=sflag, size = 0x4, scoped, tag = 'scoped memory for tpu_custom_call.1']
    #allocation9 [shape = 'u8[4096]{0}', space=vmem, size = 0x1000, scoped, tag = 'input window, operand 5, single buffered']
    #allocation10 [shape = 'u8[4096]{0}', space=vmem, size = 0x1000, scoped, tag = 'input window, operand 6, single buffered']
    #allocation11 [shape = 's32[1]{0}', space=sflag, size = 0x4, scoped, tag = 'scoped memory for tpu_custom_call.1']
    #allocation12 [shape = 'u8[512]{0}', space=smem, size = 0x200, scoped, tag = 'output window, operand 0, single buffered']
    #allocation13 [shape = 'u8[512]{0}', space=smem, size = 0x200, scoped, tag = 'output window, operand 1, single buffered']
    #allocation14 [shape = 's32[1]{0}', space=sflag, size = 0x4, scoped, tag = 'scoped memory for tpu_custom_call.1']
    #allocation15 [shape = 'u8[512]{0}', space=smem, size = 0x200, scoped, tag = 'output window, operand 2, single buffered']
    #allocation16 [shape = 'u8[512]{0}', space=smem, size = 0x200, scoped, tag = 'output window, operand 3, single buffered']
    #allocation17 [shape = 's32[1]{0}', space=sflag, size = 0x4, scoped, tag = 'scoped memory for tpu_custom_call.1']
    %16 = vsyncpa [#allocation5], 0
    %17 = vsyncpa [#allocation8], 0
    %18 = vsyncpa [#allocation11], 0
    %19 = vsyncpa [#allocation6], 0
    %20 = vsyncpa [#allocation14], 0
    %21 = vsyncpa [#allocation17], 0
    // Predicated region
    $region2: #{tpu_custom_call.1} parent=1 // pred_check
      _
    $region3: #{tpu_custom_call.1} parent=1 // pred_check_branch
      %23 = sbr.rel (0) target = $region5
    $region4: #{tpu_custom_call.1} parent=1 // pred_region
      %25 = vsyncadd [#allocation5], 0
      %s27 = sshll.u32 %s0, 4
      %s28 = int_to_ptr.hbm [resolvable:$true] %s27
      %s29 = sshll.u32 [#allocation4], 4
      %s30 = int_to_ptr.vmem [resolvable:$true] %s29
      %32 = dma.hbm_to_vmem [thread:$0]  %s28, 32, %s30, [#allocation5]
    $region5: #{tpu_custom_call.1} parent=1 // pred_fallthru
      _
    // Predicated region
    $region6: #{tpu_custom_call.1} parent=1 // pred_check
      _
    $region7: #{tpu_custom_call.1} parent=1 // pred_check_branch
      %34 = sbr.rel (0) target = $region9
    $region8: #{tpu_custom_call.1} parent=1 // pred_region
      %36 = vsyncadd [#allocation8], 0
      %s38 = sshll.u32 %s1, 4
      %s39 = int_to_ptr.hbm [resolvable:$true] %s38
      %s40 = sshll.u32 [#allocation7], 4
      %s41 = int_to_ptr.vmem [resolvable:$true] %s40
      %43 = dma.hbm_to_vmem [thread:$0]  %s39, 32, %s41, [#allocation8]
    $region9: #{tpu_custom_call.1} parent=1 // pred_fallthru
      _
    // Predicated region
    $region10: #{tpu_custom_call.1} parent=1 // pred_check
      _
    $region11: #{tpu_custom_call.1} parent=1 // pred_check_branch
      %45 = sbr.rel (0) target = $region13
    $region12: #{tpu_custom_call.1} parent=1 // pred_region
      _
    $region13: #{tpu_custom_call.1} parent=1 // pred_fallthru
      _
    // Predicated region
    $region14: #{tpu_custom_call.1} parent=1 // pred_check
      _
    $region15: #{tpu_custom_call.1} parent=1 // pred_check_branch
      %47 = sbr.rel (0) target = $region17
    $region16: #{tpu_custom_call.1} parent=1 // pred_region
      _
    $region17: #{tpu_custom_call.1} parent=1 // pred_fallthru
      _
    // Predicated region
    $region18: #{tpu_custom_call.1} parent=1 // pred_check
      _
    $region19: #{tpu_custom_call.1} parent=1 // pred_check_branch
      %49 = sbr.rel (0) target = $region21
    $region20: #{tpu_custom_call.1} parent=1 // pred_region
      _
    $region21: #{tpu_custom_call.1} parent=1 // pred_fallthru
      _
    // Predicated region
    $region22: #{tpu_custom_call.1} parent=1 // pred_check
      _
    $region23: #{tpu_custom_call.1} parent=1 // pred_check_branch
      %51 = sbr.rel (0) target = $region25
    $region24: #{tpu_custom_call.1} parent=1 // pred_region
      %53 = vsyncadd [#allocation8], 0
      %s55 = sshll.u32 %s5, 4
      %s56 = int_to_ptr.hbm [resolvable:$true] %s55
      %s57 = sshll.u32 [#allocation9], 4
      %s58 = int_to_ptr.vmem [resolvable:$true] %s57
      %60 = dma.hbm_to_vmem [thread:$0]  %s56, 128, %s58, [#allocation8]
    $region25: #{tpu_custom_call.1} parent=1 // pred_fallthru
      _
    // Predicated region
    $region26: #{tpu_custom_call.1} parent=1 // pred_check
      _
    $region27: #{tpu_custom_call.1} parent=1 // pred_check_branch
      %62 = sbr.rel (0) target = $region29
    $region28: #{tpu_custom_call.1} parent=1 // pred_region
      %64 = vsyncadd [#allocation11], 0
      %s66 = sshll.u32 %s6, 4
      %s67 = int_to_ptr.hbm [resolvable:$true] %s66
      %s68 = sshll.u32 [#allocation10], 4
      %s69 = int_to_ptr.vmem [resolvable:$true] %s68
      %71 = dma.hbm_to_vmem [thread:$0]  %s67, 128, %s69, [#allocation11]
    $region29: #{tpu_custom_call.1} parent=1 // pred_fallthru
      _
    // Predicated region
    $region30: #{tpu_custom_call.1} parent=1 // pred_check
      _
    $region31: #{tpu_custom_call.1} parent=1 // pred_check_branch
      %73 = sbr.rel (0) target = $region33
    $region32: #{tpu_custom_call.1} parent=1 // pred_region
      %75 = dma.done [#allocation5], 32
    $region33: #{tpu_custom_call.1} parent=1 // pred_fallthru
      _
    // Predicated region
    $region34: #{tpu_custom_call.1} parent=1 // pred_check
      _
    $region35: #{tpu_custom_call.1} parent=1 // pred_check_branch
      %77 = sbr.rel (0) target = $region37
    $region36: #{tpu_custom_call.1} parent=1 // pred_region
      %79 = dma.done [#allocation8], 32
    $region37: #{tpu_custom_call.1} parent=1 // pred_fallthru
      _
    // Predicated region
    $region38: #{tpu_custom_call.1} parent=1 // pred_check
      _
    $region39: #{tpu_custom_call.1} parent=1 // pred_check_branch
      %81 = sbr.rel (0) target = $region41
    $region40: #{tpu_custom_call.1} parent=1 // pred_region
      %83 = dma.done [#allocation8], 128
    $region41: #{tpu_custom_call.1} parent=1 // pred_fallthru
      _
    // Predicated region
    $region42: #{tpu_custom_call.1} parent=1 // pred_check
      _
    $region43: #{tpu_custom_call.1} parent=1 // pred_check_branch
      %85 = sbr.rel (0) target = $region45
    $region44: #{tpu_custom_call.1} parent=1 // pred_region
      %87 = dma.done [#allocation11], 128
    $region45: #{tpu_custom_call.1} parent=1 // pred_fallthru
      _
    %p88 = scmp.eq.s32.totalorder 0, 0
    // Predicated region
    $region46: #{tpu_custom_call.1} parent=1 // pred_check
      %p89 = pneg %p88
    $region47: #{tpu_custom_call.1} parent=1 // pred_check_branch
      %91 = sbr.rel (%p89) target = $region49
    $region48: #{tpu_custom_call.1} parent=1 // pred_region
      %v92 = vld [vmem:[#allocation4] sm:$0x3]
      %v93 = vld [vmem:[#allocation7] sm:$0x3]
      %v94 = vand.u32 2147483647, %v92
      %v95 = vsub.f32 0.0, %v94
      %v96 = vmul.f32 %v95, 1.442695
      %v97 = vpow.pop %v96
      %v98 = vadd.f32 %v97, 1.0
      %v99 = vlog2.pop %v98
      %v100 = vmul.f32 %v99, 0.6931472
      %v101 = vsub.f32 0.0, %v92
      %v102 = vmax.f32 %v101, 0.0
      %v103 = vadd.f32 %v102, %v100
      %v104 = vadd.f32 %v103, %v92
      %v105 = vmul.f32 %v93, 2.2
      %v106 = vmul.f32 %v105, %v103
      %v107 = vsub.f32 1.0, %v93
      %v108 = vmul.f32 %v107, %v104
      %v109 = vadd.f32 %v106, %v108
      %v110 = vmul.f32 %v109, 0.0625
      %vm111 = vcmask 58368
      %v112 = vsel %vm111, %v110, 0.0
      %113 = vadd.xlane.f32.xlu0 %v112
      %v114 = vpop.xlane.xlu0 %113
      %v115 = vrot.slane %v114, 4
      %v116 = vadd.f32 %v114, %v115
      %v117 = vrot.slane %v116, 2
      %v118 = vadd.f32 %v116, %v117
      %v119 = vrot.slane %v118, 1
      %v120 = vadd.f32 %v118, %v119
      %s121 = vtos %v120
      %s122 = scalar_lea.smem [#allocation12], 0
      %123 = sst [smem:[%s122]] %s121
      %v124 = vld [vmem:[%s2] sm:$0x1f]
      %v125 = vld [vmem:[%s3] sm:$0x1]
      %v126 = vld [vmem:[%s4] sm:$0x1f]
      %v127 = vlaneseq
      %v128 = vshrl.u32 %v127, 7
      %v129 = vperm.slane %v125, 0
      %vm130 = vcmp.eq.s32.totalorder %v128, %v129
      %v131 = vsel %vm130, 1, 0
      %v132 = vcvt.s32.f32 %v131
      %vm133 = vcmask 126976
      %v134 = vsel %vm133, %v124, -inf
      %v135 = vrot.slane %v134, 4
      %v136 = vmax.f32 %v134, %v135
      %v137 = vrot.slane %v136, 2
      %v138 = vmax.f32 %v136, %v137
      %v139 = vrot.slane %v138, 1
      %v140 = vmax.f32 %v138, %v139
      %v141 = vsub.f32 %v124, %v140
      %v142 = vmul.f32 %v141, 1.442695
      %v143 = vpow.pop %v142
      %v144 = vsel %vm133, %v143, 0.0
      %v145 = vrot.slane %v144, 4
      %v146 = vadd.f32 %v144, %v145
      %v147 = vrot.slane %v146, 2
      %v148 = vadd.f32 %v146, %v147
      %v149 = vrot.slane %v148, 1
      %v150 = vadd.f32 %v148, %v149
      %v151 = vlog2.pop %v150
      %v152 = vmul.f32 %v151, 0.6931472
      %v153 = vadd.f32 %v140, %v152
      %v154 = vmul.f32 %v132, %v124
      %v155 = vsel %vm133, %v154, 0.0
      %v156 = vrot.slane %v155, 4
      %v157 = vadd.f32 %v155, %v156
      %v158 = vrot.slane %v157, 2
      %v159 = vadd.f32 %v157, %v158
      %v160 = vrot.slane %v159, 1
      %v161 = vadd.f32 %v159, %v160
      %163 = vset.pattern.permute.xlu0 0
      %164 = vperm.xlu0 %163, %v126
      %v165 = vpop.permute.xlu0 %164
      %v167 = vmul.f32 %v132, %v165
      %v168 = vsel %vm133, %v167, 0.0
      %v169 = vrot.slane %v168, 4
      %v170 = vadd.f32 %v168, %v169
      %v171 = vrot.slane %v170, 2
      %v172 = vadd.f32 %v170, %v171
      %v173 = vrot.slane %v172, 1
      %v174 = vadd.f32 %v172, %v173
      %v175 = vsub.f32 %v153, %v161
      %v176 = vmul.f32 %v174, %v175
      %vm177 = vcmask 130048
      %v178 = vsel %vm177, %v176, 0.0
      %179 = vadd.xlane.f32.xlu0 %v178
      %v180 = vpop.xlane.xlu0 %179
      %v181 = vsel %vm177, %v174, 0.0
      %182 = vadd.xlane.f32.xlu0 %v181
      %v183 = vpop.xlane.xlu0 %182
      %v184 = vrcp.pop %v183
      %v185 = vmul.f32 %v183, %v184
      %v186 = vsub.f32 1.0, %v185
      %v187 = vmul.f32 %v184, %v186
      %v188 = vadd.f32 %v184, %v187
      %vm189 = vweird.f32 %v183
      %vm190 = vweird.f32 %v184
      %vm191 = vmor %vm189, %vm190
      %v192 = vsel %vm191, %v184, %v188
      %v193 = vand.u32 2147483647, %v183
      %vm194 = vcmp.eq.f32.partialorder %v193, 8.507059e+37
      %v195 = vand.u32 %v183, 2147483648
      %v196 = vor.u32 1.1754944e-38, %v195
      %v197 = vsel %vm194, %v196, %v192
      %v198 = vmul.f32 %v180, %v197
      %v199 = vadd.f32 %v198, 0.0
      %s200 = vtos %v199
      %s201 = scalar_lea.smem [#allocation13], 0
      %202 = sst [smem:[%s201]] %s200
      %vm203 = vcmask 7168
      %204 = vst.msk [vmem:[#allocation2] sm:$0xff] %vm203, 0.0
      %205 = vst.msk [vmem:[#allocation3] sm:$0xff] %vm203, 0.0
    $region49: #{tpu_custom_call.1} parent=1 // pred_fallthru
      _
    %v206 = vld [vmem:[#allocation9] sm:$0xff]
    %v207 = vld [vmem:[#allocation10] sm:$0xff]
    %v208 = vand.u32 2147483647, %v206
    %v209 = vsub.f32 0.0, %v208
    %v210 = vmul.f32 %v209, 1.442695
    %v211 = vpow.pop %v210
    %v212 = vadd.f32 %v211, 1.0
    %v213 = vsub.f32 0.0, %v206
    %v214 = vmax.f32 %v213, 0.0
    %v215 = vlog2.pop %v212
    %v216 = vmul.f32 %v215, 0.6931472
    %v217 = vadd.f32 %v214, %v216
    %v218 = vadd.f32 %v217, %v206
    %v219 = vmul.f32 %v207, %v217
    %v220 = vsub.f32 1.0, %v207
    %v221 = vmul.f32 %v220, %v218
    %v222 = vadd.f32 %v219, %v221
    %vm223 = vcmp.ge.f32.partialorder %v206, 0.0
    %v224 = vsel %vm223, 1.0, %v211
    %v225 = vrcp.pop %v212
    %v226 = vmul.f32 %v224, %v225
    %v227 = vlaneseq
    %v228 = vshrl.u32 %v227, 7
    %s229 = smul.u32 0, 8
    %v230 = vstv %s229
    %v231 = vadd.s32 %v228, %v230
    %vm232 = vcmp.lt.s32.totalorder %v231, 5
    %v233 = vsel %vm232, 1, 0
    %v234 = vcvt.s32.f32 %v233
    %vm235 = vcmask 130048
    %v236 = vsel %vm235, %v222, 0.0
    %237 = vadd.xlane.f32.xlu0 %v236
    %v238 = vpop.xlane.xlu0 %237
    %v239 = vmul.f32 %v238, 0.0625
    %v240 = vmul.f32 %v226, %v207
    %v241 = vsel %vm235, %v240, 0.0
    %242 = vadd.xlane.f32.xlu0 %v241
    %v243 = vpop.xlane.xlu0 %242
    %v244 = vmul.f32 %v243, 2.0
    %v245 = vsel %vm235, %v226, 0.0
    %246 = vadd.xlane.f32.xlu0 %v245
    %v247 = vpop.xlane.xlu0 %246
    %v248 = vsel %vm235, %v207, 0.0
    %249 = vadd.xlane.f32.xlu0 %v248
    %v250 = vpop.xlane.xlu0 %249
    %v251 = vadd.f32 %v247, %v250
    %v252 = vadd.f32 %v244, 1.0
    %v253 = vadd.f32 %v251, 1.0
    %v254 = vrcp.pop %v253
    %v255 = vmul.f32 %v253, %v254
    %v256 = vsub.f32 1.0, %v255
    %v257 = vmul.f32 %v254, %v256
    %v258 = vadd.f32 %v254, %v257
    %vm259 = vweird.f32 %v253
    %vm260 = vweird.f32 %v254
    %vm261 = vmor %vm259, %vm260
    %v262 = vsel %vm261, %v254, %v258
    %v263 = vand.u32 2147483647, %v253
    %vm264 = vcmp.eq.f32.partialorder %v263, 8.507059e+37
    %v265 = vand.u32 %v253, 2147483648
    %v266 = vor.u32 1.1754944e-38, %v265
    %v267 = vsel %vm264, %v266, %v262
    %v268 = vmul.f32 %v252, %v267
    %v269 = vsub.f32 1.0, %v268
    %v270 = vld [vmem:[#allocation2] sm:$0xff]
    %v271 = vmul.f32 %v239, %v234
    %v272 = vadd.f32 %v270, %v271
    %vm273 = vcmask 7168
    %274 = vst.msk [vmem:[#allocation2] sm:$0xff] %vm273, %v272
    %v275 = vld [vmem:[#allocation3] sm:$0xff]
    %v276 = vmul.f32 %v269, %v234
    %v277 = vadd.f32 %v275, %v276
    %278 = vst.msk [vmem:[#allocation3] sm:$0xff] %vm273, %v277
    // Predicated region
    $region50: #{tpu_custom_call.1} parent=1 // pred_check
      %p279 = pneg %p88
    $region51: #{tpu_custom_call.1} parent=1 // pred_check_branch
      %281 = sbr.rel (%p279) target = $region53
    $region52: #{tpu_custom_call.1} parent=1 // pred_region
      %v282 = vld [vmem:[#allocation2] sm:$0xff]
      %v283 = vmul.f32 %v282, 0.2
      %v284 = vsel %vm273, %v283, 0.0
      %285 = vadd.xlane.f32.xlu0 %v284
      %v286 = vpop.xlane.xlu0 %285
      %v287 = vrot.slane %v286, 4
      %v288 = vadd.f32 %v286, %v287
      %v289 = vrot.slane %v288, 2
      %v290 = vadd.f32 %v288, %v289
      %v291 = vrot.slane %v290, 1
      %v292 = vadd.f32 %v290, %v291
      %s293 = vtos %v292
      %s294 = scalar_lea.smem [#allocation15], 0
      %295 = sst [smem:[%s294]] %s293
      %v296 = vld [vmem:[#allocation3] sm:$0xff]
      %v297 = vmul.f32 %v296, 0.2
      %v298 = vsel %vm273, %v297, 0.0
      %299 = vadd.xlane.f32.xlu0 %v298
      %v300 = vpop.xlane.xlu0 %299
      %v301 = vrot.slane %v300, 4
      %v302 = vadd.f32 %v300, %v301
      %v303 = vrot.slane %v302, 2
      %v304 = vadd.f32 %v302, %v303
      %v305 = vrot.slane %v304, 1
      %v306 = vadd.f32 %v304, %v305
      %s307 = vtos %v306
      %s308 = scalar_lea.smem [#allocation16], 0
      %309 = sst [smem:[%s308]] %s307
    $region53: #{tpu_custom_call.1} parent=1 // pred_fallthru
      _
    // Predicated region
    $region54: #{tpu_custom_call.1} parent=1 // pred_check
      _
    $region55: #{tpu_custom_call.1} parent=1 // pred_check_branch
      %311 = sbr.rel (0) target = $region57
    $region56: #{tpu_custom_call.1} parent=1 // pred_region
      %313 = vsyncadd [#allocation6], 0
      %s315 = sshll.u32 %s7, 4
      %s316 = int_to_ptr.hbm [resolvable:$true] %s315
      %318 = dma.smem_to_hbm [#allocation12], 16, %s316, [#allocation6]
    $region57: #{tpu_custom_call.1} parent=1 // pred_fallthru
      _
    // Predicated region
    $region58: #{tpu_custom_call.1} parent=1 // pred_check
      _
    $region59: #{tpu_custom_call.1} parent=1 // pred_check_branch
      %320 = sbr.rel (0) target = $region61
    $region60: #{tpu_custom_call.1} parent=1 // pred_region
      %322 = vsyncadd [#allocation14], 0
      %s324 = sshll.u32 %s8, 4
      %s325 = int_to_ptr.hbm [resolvable:$true] %s324
      %327 = dma.smem_to_hbm [#allocation13], 16, %s325, [#allocation14]
    $region61: #{tpu_custom_call.1} parent=1 // pred_fallthru
      _
    // Predicated region
    $region62: #{tpu_custom_call.1} parent=1 // pred_check
      _
    $region63: #{tpu_custom_call.1} parent=1 // pred_check_branch
      %329 = sbr.rel (0) target = $region65
    $region64: #{tpu_custom_call.1} parent=1 // pred_region
      %331 = vsyncadd [#allocation14], 0
      %s333 = sshll.u32 %s9, 4
      %s334 = int_to_ptr.hbm [resolvable:$true] %s333
      %336 = dma.smem_to_hbm [#allocation15], 16, %s334, [#allocation14]
    $region65: #{tpu_custom_call.1} parent=1 // pred_fallthru
      _
    // Predicated region
    $region66: #{tpu_custom_call.1} parent=1 // pred_check
      _
    $region67: #{tpu_custom_call.1} parent=1 // pred_check_branch
      %338 = sbr.rel (0) target = $region69
    $region68: #{tpu_custom_call.1} parent=1 // pred_region
      %340 = vsyncadd [#allocation17], 0
      %s342 = sshll.u32 %s10, 4
      %s343 = int_to_ptr.hbm [resolvable:$true] %s342
      %345 = dma.smem_to_hbm [#allocation16], 16, %s343, [#allocation17]
    $region69: #{tpu_custom_call.1} parent=1 // pred_fallthru
      _
    // Predicated region
    $region70: #{tpu_custom_call.1} parent=1 // pred_check
      _
    $region71: #{tpu_custom_call.1} parent=1 // pred_check_branch
      %347 = sbr.rel (0) target = $region73
    $region72: #{tpu_custom_call.1} parent=1 // pred_region
      %349 = dma.done [#allocation6], 16
    $region73: #{tpu_custom_call.1} parent=1 // pred_fallthru
      _
    // Predicated region
    $region74: #{tpu_custom_call.1} parent=1 // pred_check
      _
    $region75: #{tpu_custom_call.1} parent=1 // pred_check_branch
      %351 = sbr.rel (0) target = $region77
    $region76: #{tpu_custom_call.1} parent=1 // pred_region
      %353 = dma.done [#allocation14], 16
    $region77: #{tpu_custom_call.1} parent=1 // pred_fallthru
      _
    // Predicated region
    $region78: #{tpu_custom_call.1} parent=1 // pred_check
      _
    $region79: #{tpu_custom_call.1} parent=1 // pred_check_branch
      %355 = sbr.rel (0) target = $region81
    $region80: #{tpu_custom_call.1} parent=1 // pred_region
      %357 = dma.done [#allocation14], 16
    $region81: #{tpu_custom_call.1} parent=1 // pred_fallthru
      _
    // Predicated region
    $region82: #{tpu_custom_call.1} parent=1 // pred_check
      _
    $region83: #{tpu_custom_call.1} parent=1 // pred_check_branch
      %359 = sbr.rel (0) target = $region85
    $region84: #{tpu_custom_call.1} parent=1 // pred_region
      %361 = dma.done [#allocation17], 16
    $region85: #{tpu_custom_call.1} parent=1 // pred_fallthru
      _
    %362 = sfence
    %363 = vsyncpa [#allocation5], 1
    %364 = vsyncpa [#allocation8], 1
    %365 = vsyncpa [#allocation11], 1
    %366 = vsyncpa [#allocation6], 1
    %367 = vsyncpa [#allocation14], 1
    %368 = vsyncpa [#allocation17], 1

</llo_original>
